<compile_context>
chip_gen: v7x
topology: tpu7x:2x2x1
jax: 0.10.0
libtpu: 0.0.40
codegen_flags: <defaults>
</compile_context>

<pallas_src>
import jax
import jax.numpy as jnp
from jax.experimental import pallas as pl
from jax.experimental.pallas import tpu as pltpu


# --------------------------------------------------------------------------- kernel
def _vl_concat_kernel(x_ref, w_ref, b_ref, o_ref):
    # x_ref : (1, C_in,  TN)   one (batch, spatial-tile) slab, spatial on lanes
    # w_ref : (C_out, C_in)    fused (W_vis @ W_vl_vis)^T, resident across tiles
    # b_ref : (1, C_out, 1)    fused per-(batch, channel) bias (lang path + conv biases)
    # o_ref : (1, C_out, TN)
    acc = jnp.dot(w_ref[...], x_ref[0], preferred_element_type=jnp.float32)   # (C_out, TN)
    o_ref[0] = (acc + b_ref[0]).astype(o_ref.dtype)


# --------------------------------------------------------------------------- helpers
def _choose_tile(hw, max_tn):
    """Spatial tile (lane) width: multiple of 128, never larger than the level."""
    if hw < 128:
        return hw                       # full-dim block (exempt from the 128 rule)
    return min(max_tn, (hw // 128) * 128)


def _fuse_level_params(hidden, p):
    """Fold Linear + Conv1x1(vis) + Conv1x1(concat) into one weight + one bias (f32)."""
    w_fused = (p["w_vis"] @ p["w_vl_vis"]).T                                  # (C_out, C_in)
    lang = hidden @ p["w_fc"] + p["b_fc"][0]                                  # (B, C_out)
    bias = lang @ p["w_vl_lang"] + p["b_vis"][0] @ p["w_vl_vis"] + p["b_vl"][0]
    return w_fused, bias[..., None]                                           # (B, C_out, 1)


def _level_call(x_flat, w_fused, bias, *, tn, compute_dtype):
    B, C_in, HW = x_flat.shape
    C_out = w_fused.shape[0]
    n_t = pl.cdiv(HW, tn)
    out_dtype = x_flat.dtype

    if compute_dtype is not None:       # optional bf16 path (folding stays f32)
        x_flat = x_flat.astype(compute_dtype)
        w_fused = w_fused.astype(compute_dtype)

    in_item = jnp.dtype(x_flat.dtype).itemsize
    out_item = jnp.dtype(out_dtype).itemsize
    cost = pl.CostEstimate(
        flops=2 * B * C_out * C_in * HW,
        transcendentals=0,
        bytes_accessed=(in_item * (B * C_in * HW + C_out * C_in)
                        + out_item * B * C_out * HW
                        + 4 * bias.size))

    return pl.pallas_call(
        _vl_concat_kernel,
        out_shape=jax.ShapeDtypeStruct((B, C_out, HW), out_dtype),
        grid=(B, n_t),
        in_specs=[
            pl.BlockSpec((1, C_in, tn), lambda b, t: (b, 0, t)),     # activation tile
            pl.BlockSpec((C_out, C_in), lambda b, t: (0, 0)),        # fused weight (resident)
            pl.BlockSpec((1, C_out, 1), lambda b, t: (b, 0, 0)),     # fused bias   (resident per b)
        ],
        out_specs=pl.BlockSpec((1, C_out, tn), lambda b, t: (b, 0, t)),
        compiler_params=pltpu.CompilerParams(
            dimension_semantics=("parallel", "parallel"),            # v7x megacore over (b, tile)
            vmem_limit_bytes=32 * 1024 * 1024),
        cost_estimate=cost,
    )(x_flat, w_fused, bias)


# --------------------------------------------------------------------------- forward
def vl_concat_forward(visual_feat, context, hidden, embedded, params,
                      *, max_tile_lanes=2048, compute_dtype=None):
    """Pallas implementation of VL_Concat.forward. Returns a tuple of NCHW arrays."""
    del context, embedded               # unused, as in the PyTorch module's forward
    visual_feat = list(visual_feat)

    outs = []
    for x, p in zip(visual_feat, params):
        B, C_in, H, W = x.shape
        HW = H * W
        w_fused, bias = _fuse_level_params(hidden, p)                # plain JAX f32 fold
        tn = _choose_tile(HW, max_tile_lanes)
        out_flat = _level_call(x.reshape(B, C_in, HW),               # free metadata reshape
                               w_fused, bias,
                               tn=tn, compute_dtype=compute_dtype)
        outs.append(out_flat.reshape(B, w_fused.shape[0], H, W))     # free metadata reshape
    return tuple(outs)


# --------------------------------------------------------------------------- params / reference
def init_params(key, num_featmaps, hidden_size, c_in, c_out):
    params = []
    for f in range(num_featmaps):
        ks = jax.random.split(jax.random.fold_in(key, f), 7)
        s_fc = 1.0 / jnp.sqrt(2.0 * hidden_size)
        s_vis = 1.0 / jnp.sqrt(float(c_in))
        s_vl = 1.0 / jnp.sqrt(2.0 * c_out)
        params.append({
            # stored already-transposed: (in_features, out_features)
            "w_fc": jax.random.uniform(ks[0], (2 * hidden_size, c_out), jnp.float32, -s_fc, s_fc),
            "b_fc": jax.random.uniform(ks[1], (1, c_out), jnp.float32, -s_fc, s_fc),
            "w_vis": jax.random.uniform(ks[2], (c_in, c_out), jnp.float32, -s_vis, s_vis),
            "b_vis": jax.random.uniform(ks[3], (1, c_out), jnp.float32, -s_vis, s_vis),
            # vl conv weight split into the lang half and the visual half of the concat
            "w_vl_lang": jax.random.uniform(ks[4], (c_out, c_out), jnp.float32, -s_vl, s_vl),
            "w_vl_vis": jax.random.uniform(ks[5], (c_out, c_out), jnp.float32, -s_vl, s_vl),
            "b_vl": jax.random.uniform(ks[6], (1, c_out), jnp.float32, -s_vl, s_vl),
        })
    return params


def _ref_level(x_nchw, hidden, p):
    """Pure-JAX reference mirroring the (un-folded) PyTorch forward for one level."""
    lang = hidden @ p["w_fc"] + p["b_fc"][0]                       # (B, C_out)
    x = jnp.transpose(x_nchw, (0, 2, 3, 1))                        # (B, H, W, C_in)
    vis = x @ p["w_vis"] + p["b_vis"][0]                           # (B, H, W, C_out)
    out = (vis @ p["w_vl_vis"]
           + (lang @ p["w_vl_lang"])[:, None, None, :]
           + p["b_vl"][0])
    return jnp.transpose(out, (0, 3, 1, 2))


# --------------------------------------------------------------------------- test
if __name__ == "__main__":
    # Small, forward-consistent shapes (the module's .view requires c_in == c_out).
    B = 2
    hidden_size = 32          # -> hidden input dim = 2 * hidden_size = 64
    c_in = c_out = 16
    num_featmaps = 3
    spatials = [16, 8, 4]     # FPN-like pyramid

    key = jax.random.PRNGKey(0)
    k_feat, k_hid, k_ctx, k_emb, k_par = jax.random.split(key, 5)

    visual_feat = [
        jax.random.normal(jax.random.fold_in(k_feat, i), (B, c_in, s, s), jnp.float32)
        for i, s in enumerate(spatials)
    ]
    hidden = jax.random.normal(k_hid, (B, 2 * hidden_size), jnp.float32)
    context = jax.random.normal(k_ctx, (B, 2 * hidden_size), jnp.float32)   # unused by forward
    embedded = jax.random.normal(k_emb, (B, 2 * hidden_size), jnp.float32)  # unused by forward

    params = init_params(k_par, num_featmaps, hidden_size, c_in, c_out)

    fwd = jax.jit(vl_concat_forward)
    outs = fwd(visual_feat, context, hidden, embedded, params)
    outs = jax.block_until_ready(outs)

    # Verify against the pure-JAX reference of the PyTorch forward.
    for x, p, o in zip(visual_feat, params, outs):
        ref = _ref_level(x, hidden, p)
        assert o.shape == x.shape[:1] + (c_out,) + x.shape[2:]
        assert jnp.allclose(o, ref, atol=1e-4, rtol=1e-4), float(jnp.max(jnp.abs(o - ref)))

    print("KERNEL_OK")
</pallas_src>

<mosaic_0001>
module attributes {stable_mosaic.version = 11 : i64} {
  func.func @_vl_concat_kernel(%arg0: i32, %arg1: i32, %arg2: memref<1x16x16xf32, #tpu.memory_space<vmem>>, %arg3: memref<16x16xf32, #tpu.memory_space<vmem>>, %arg4: memref<1x16x1xf32, #tpu.memory_space<vmem>>, %arg5: memref<1x16x16xf32, #tpu.memory_space<vmem>>) attributes {dimension_semantics = [#tpu.dimension_semantics<parallel>, #tpu.dimension_semantics<parallel>], iteration_bounds = array<i64: 2, 1>, scalar_prefetch = 0 : i64, scratch_operands = 0 : i64, tpu.core_type = #tpu.core_type<tc>, window_params = [{transform_indices = @transform_0, window_bounds = array<i64: 1, 16, 16>}, {pipeline_mode = #tpu.pipeline_mode<synchronous>, transform_indices = @transform_1, window_bounds = array<i64: 16, 16>}, {transform_indices = @transform_2, window_bounds = array<i64: 1, 16, 1>}, {transform_indices = @transform_3, window_bounds = array<i64: 1, 16, 16>}]} {
    %c0 = arith.constant 0 : index
    %c0_0 = arith.constant 0 : index
    %0 = vector.load %arg3[%c0, %c0_0] : memref<16x16xf32, #tpu.memory_space<vmem>>, vector<16x16xf32>
    %c0_1 = arith.constant 0 : index
    %c0_2 = arith.constant 0 : index
    %c0_3 = arith.constant 0 : index
    %1 = vector.load %arg2[%c0_1, %c0_2, %c0_3] : memref<1x16x16xf32, #tpu.memory_space<vmem>>, vector<1x16x16xf32>
    %2 = vector.shape_cast %1 : vector<1x16x16xf32> to vector<16x16xf32>
    %cst = arith.constant dense<0.000000e+00> : vector<16x16xf32>
    %3 = tpu.matmul %0, %2, %cst {dimension_numbers = #tpu.dot_dimension_numbers<[1], [0], [0], [1], [0, 0, 1, 1], [], []>} : vector<16x16xf32>, vector<16x16xf32>, vector<16x16xf32> -> vector<16x16xf32>
    %c0_4 = arith.constant 0 : index
    %c0_5 = arith.constant 0 : index
    %c0_6 = arith.constant 0 : index
    %4 = vector.load %arg4[%c0_4, %c0_5, %c0_6] : memref<1x16x1xf32, #tpu.memory_space<vmem>>, vector<1x16x1xf32>
    %5 = vector.shape_cast %4 : vector<1x16x1xf32> to vector<16x1xf32>
    %6 = vector.broadcast %5 : vector<16x1xf32> to vector<16x16xf32>
    %7 = arith.addf %3, %6 : vector<16x16xf32>
    %c0_7 = arith.constant 0 : index
    %c0_8 = arith.constant 0 : index
    %c0_9 = arith.constant 0 : index
    %8 = vector.load %arg5[%c0_7, %c0_8, %c0_9] : memref<1x16x16xf32, #tpu.memory_space<vmem>>, vector<1x16x16xf32>
    %9 = vector.shape_cast %8 : vector<1x16x16xf32> to vector<16x16xf32>
    %10 = vector.shape_cast %7 : vector<16x16xf32> to vector<1x16x16xf32>
    tpu.vector_store %arg5[%c0_7, %c0_8, %c0_9], %10 {strides = array<i32>} : memref<1x16x16xf32, #tpu.memory_space<vmem>>, vector<1x16x16xf32>,
    return
  }
  func.func @transform_0(%arg0: i32, %arg1: i32) -> (i32, i32, i32) {
    %c0_i32 = arith.constant 0 : i32
    %c0_i32_0 = arith.constant 0 : i32
    return %arg0, %c0_i32, %arg1 : i32, i32, i32
  }
  func.func @transform_1(%arg0: i32, %arg1: i32) -> (i32, i32) {
    %c0_i32 = arith.constant 0 : i32
    %c0_i32_0 = arith.constant 0 : i32
    %c0_i32_1 = arith.constant 0 : i32
    return %c0_i32, %c0_i32_0 : i32, i32
  }
  func.func @transform_2(%arg0: i32, %arg1: i32) -> (i32, i32, i32) {
    %c0_i32 = arith.constant 0 : i32
    %c0_i32_0 = arith.constant 0 : i32
    %c0_i32_1 = arith.constant 0 : i32
    return %arg0, %c0_i32, %c0_i32_0 : i32, i32, i32
  }
  func.func @transform_3(%arg0: i32, %arg1: i32) -> (i32, i32, i32) {
    %c0_i32 = arith.constant 0 : i32
    %c0_i32_0 = arith.constant 0 : i32
    return %arg0, %c0_i32, %arg1 : i32, i32, i32
  }
}

module attributes {stable_mosaic.version = 11 : i64} {
  func.func @_vl_concat_kernel(%arg0: i32, %arg1: i32, %arg2: memref<1x16x64xf32, #tpu.memory_space<vmem>>, %arg3: memref<16x16xf32, #tpu.memory_space<vmem>>, %arg4: memref<1x16x1xf32, #tpu.memory_space<vmem>>, %arg5: memref<1x16x64xf32, #tpu.memory_space<vmem>>) attributes {dimension_semantics = [#tpu.dimension_semantics<parallel>, #tpu.dimension_semantics<parallel>], iteration_bounds = array<i64: 2, 1>, scalar_prefetch = 0 : i64, scratch_operands = 0 : i64, tpu.core_type = #tpu.core_type<tc>, window_params = [{transform_indices = @transform_0, window_bounds = array<i64: 1, 16, 64>}, {pipeline_mode = #tpu.pipeline_mode<synchronous>, transform_indices = @transform_1, window_bounds = array<i64: 16, 16>}, {transform_indices = @transform_2, window_bounds = array<i64: 1, 16, 1>}, {transform_indices = @transform_3, window_bounds = array<i64: 1, 16, 64>}]} {
    %c0 = arith.constant 0 : index
    %c0_0 = arith.constant 0 : index
    %0 = vector.load %arg3[%c0, %c0_0] : memref<16x16xf32, #tpu.memory_space<vmem>>, vector<16x16xf32>
    %c0_1 = arith.constant 0 : index
    %c0_2 = arith.constant 0 : index
    %c0_3 = arith.constant 0 : index
    %1 = vector.load %arg2[%c0_1, %c0_2, %c0_3] : memref<1x16x64xf32, #tpu.memory_space<vmem>>, vector<1x16x64xf32>
    %2 = vector.shape_cast %1 : vector<1x16x64xf32> to vector<16x64xf32>
    %cst = arith.constant dense<0.000000e+00> : vector<16x64xf32>
    %3 = tpu.matmul %0, %2, %cst {dimension_numbers = #tpu.dot_dimension_numbers<[1], [0], [0], [1], [0, 0, 1, 1], [], []>} : vector<16x16xf32>, vector<16x64xf32>, vector<16x64xf32> -> vector<16x64xf32>
    %c0_4 = arith.constant 0 : index
    %c0_5 = arith.constant 0 : index
    %c0_6 = arith.constant 0 : index
    %4 = vector.load %arg4[%c0_4, %c0_5, %c0_6] : memref<1x16x1xf32, #tpu.memory_space<vmem>>, vector<1x16x1xf32>
    %5 = vector.shape_cast %4 : vector<1x16x1xf32> to vector<16x1xf32>
    %6 = vector.broadcast %5 : vector<16x1xf32> to vector<16x64xf32>
    %7 = arith.addf %3, %6 : vector<16x64xf32>
    %c0_7 = arith.constant 0 : index
    %c0_8 = arith.constant 0 : index
    %c0_9 = arith.constant 0 : index
    %8 = vector.load %arg5[%c0_7, %c0_8, %c0_9] : memref<1x16x64xf32, #tpu.memory_space<vmem>>, vector<1x16x64xf32>
    %9 = vector.shape_cast %8 : vector<1x16x64xf32> to vector<16x64xf32>
    %10 = vector.shape_cast %7 : vector<16x64xf32> to vector<1x16x64xf32>
    tpu.vector_store %arg5[%c0_7, %c0_8, %c0_9], %10 {strides = array<i32>} : memref<1x16x64xf32, #tpu.memory_space<vmem>>, vector<1x16x64xf32>,
    return
  }
  func.func @transform_0(%arg0: i32, %arg1: i32) -> (i32, i32, i32) {
    %c0_i32 = arith.constant 0 : i32
    %c0_i32_0 = arith.constant 0 : i32
    return %arg0, %c0_i32, %arg1 : i32, i32, i32
  }
  func.func @transform_1(%arg0: i32, %arg1: i32) -> (i32, i32) {
    %c0_i32 = arith.constant 0 : i32
    %c0_i32_0 = arith.constant 0 : i32
    %c0_i32_1 = arith.constant 0 : i32
    return %c0_i32, %c0_i32_0 : i32, i32
  }
  func.func @transform_2(%arg0: i32, %arg1: i32) -> (i32, i32, i32) {
    %c0_i32 = arith.constant 0 : i32
    %c0_i32_0 = arith.constant 0 : i32
    %c0_i32_1 = arith.constant 0 : i32
    return %arg0, %c0_i32, %c0_i32_0 : i32, i32, i32
  }
  func.func @transform_3(%arg0: i32, %arg1: i32) -> (i32, i32, i32) {
    %c0_i32 = arith.constant 0 : i32
    %c0_i32_0 = arith.constant 0 : i32
    return %arg0, %c0_i32, %arg1 : i32, i32, i32
  }
}

module attributes {stable_mosaic.version = 11 : i64} {
  func.func @_vl_concat_kernel(%arg0: i32, %arg1: i32, %arg2: memref<1x16x256xf32, #tpu.memory_space<vmem>>, %arg3: memref<16x16xf32, #tpu.memory_space<vmem>>, %arg4: memref<1x16x1xf32, #tpu.memory_space<vmem>>, %arg5: memref<1x16x256xf32, #tpu.memory_space<vmem>>) attributes {dimension_semantics = [#tpu.dimension_semantics<parallel>, #tpu.dimension_semantics<parallel>], iteration_bounds = array<i64: 2, 1>, scalar_prefetch = 0 : i64, scratch_operands = 0 : i64, tpu.core_type = #tpu.core_type<tc>, window_params = [{transform_indices = @transform_0, window_bounds = array<i64: 1, 16, 256>}, {pipeline_mode = #tpu.pipeline_mode<synchronous>, transform_indices = @transform_1, window_bounds = array<i64: 16, 16>}, {transform_indices = @transform_2, window_bounds = array<i64: 1, 16, 1>}, {transform_indices = @transform_3, window_bounds = array<i64: 1, 16, 256>}]} {
    %c0 = arith.constant 0 : index
    %c0_0 = arith.constant 0 : index
    %0 = vector.load %arg3[%c0, %c0_0] : memref<16x16xf32, #tpu.memory_space<vmem>>, vector<16x16xf32>
    %c0_1 = arith.constant 0 : index
    %c0_2 = arith.constant 0 : index
    %c0_3 = arith.constant 0 : index
    %1 = vector.load %arg2[%c0_1, %c0_2, %c0_3] : memref<1x16x256xf32, #tpu.memory_space<vmem>>, vector<1x16x256xf32>
    %2 = vector.shape_cast %1 : vector<1x16x256xf32> to vector<16x256xf32>
    %cst = arith.constant dense<0.000000e+00> : vector<16x256xf32>
    %3 = tpu.matmul %0, %2, %cst {dimension_numbers = #tpu.dot_dimension_numbers<[1], [0], [0], [1], [0, 0, 1, 1], [], []>} : vector<16x16xf32>, vector<16x256xf32>, vector<16x256xf32> -> vector<16x256xf32>
    %c0_4 = arith.constant 0 : index
    %c0_5 = arith.constant 0 : index
    %c0_6 = arith.constant 0 : index
    %4 = vector.load %arg4[%c0_4, %c0_5, %c0_6] : memref<1x16x1xf32, #tpu.memory_space<vmem>>, vector<1x16x1xf32>
    %5 = vector.shape_cast %4 : vector<1x16x1xf32> to vector<16x1xf32>
    %6 = vector.broadcast %5 : vector<16x1xf32> to vector<16x256xf32>
    %7 = arith.addf %3, %6 : vector<16x256xf32>
    %c0_7 = arith.constant 0 : index
    %c0_8 = arith.constant 0 : index
    %c0_9 = arith.constant 0 : index
    %8 = vector.load %arg5[%c0_7, %c0_8, %c0_9] : memref<1x16x256xf32, #tpu.memory_space<vmem>>, vector<1x16x256xf32>
    %9 = vector.shape_cast %8 : vector<1x16x256xf32> to vector<16x256xf32>
    %10 = vector.shape_cast %7 : vector<16x256xf32> to vector<1x16x256xf32>
    tpu.vector_store %arg5[%c0_7, %c0_8, %c0_9], %10 {strides = array<i32>} : memref<1x16x256xf32, #tpu.memory_space<vmem>>, vector<1x16x256xf32>,
    return
  }
  func.func @transform_0(%arg0: i32, %arg1: i32) -> (i32, i32, i32) {
    %c0_i32 = arith.constant 0 : i32
    %c0_i32_0 = arith.constant 0 : i32
    return %arg0, %c0_i32, %arg1 : i32, i32, i32
  }
  func.func @transform_1(%arg0: i32, %arg1: i32) -> (i32, i32) {
    %c0_i32 = arith.constant 0 : i32
    %c0_i32_0 = arith.constant 0 : i32
    %c0_i32_1 = arith.constant 0 : i32
    return %c0_i32, %c0_i32_0 : i32, i32
  }
  func.func @transform_2(%arg0: i32, %arg1: i32) -> (i32, i32, i32) {
    %c0_i32 = arith.constant 0 : i32
    %c0_i32_0 = arith.constant 0 : i32
    %c0_i32_1 = arith.constant 0 : i32
    return %arg0, %c0_i32, %c0_i32_0 : i32, i32, i32
  }
  func.func @transform_3(%arg0: i32, %arg1: i32) -> (i32, i32, i32) {
    %c0_i32 = arith.constant 0 : i32
    %c0_i32_0 = arith.constant 0 : i32
    return %arg0, %c0_i32, %arg1 : i32, i32, i32
  }
}

</mosaic_0001>

<llo_original>
// kernel: vl_concat_forward.4
$region0: #{vl_concat_forward.4}
  #allocation0 [shape = 'u32[]', space=smem, size = 0x4, offset = 0x4, fixed_abs, tag = 'smem constant byte address 0x4 - core index']
  #allocation1 [shape = 'u32[144,128]{1,0:T(1,128)}', space=vmem, size = 0x12000, scoped, tag = 'internal scratch']
  %s0 = inlined_call_operand.vmem [shape: f32[2,16,64], index: 0, kind: input, shape index: {}]
  %s1 = inlined_call_operand.vmem [shape: f32[16,16], index: 1, kind: input, shape index: {}]
  %s2 = inlined_call_operand.vmem [shape: f32[2,16,1], index: 2, kind: input, shape index: {}]
  %s3 = inlined_call_operand.vmem [shape: f32[2,16,64], index: 3, kind: output, shape index: {}]
  %s4 = sld [smem:[#allocation0]]
  $region45: #{vl_concat_forward.4} parent=0
    _
  %s6 = ssub.s32 1, %s4
  %s7 = scalar_select 0, %s6, %s4
  loop: start=0, step=1, limit=4
  $region2: #{vl_concat_forward.4} parent=0 // loop_pre_header
    _
  $region3: #{vl_concat_forward.4} parent=0 // loop_header
    %s9 = sphi 0, %s13
    %p10 = scmp.ge.s32.totalorder %s9, 4
    %s16 = sphi 0, %s28
    %s17 = sphi 0, %s24
    %s18 = sphi 0, %s16
    %s19 = sphi 0, %s17
    %s20 = sphi 0, %s18
    %s21 = sphi 0, %s19
    %s33 = sphi 0, %s35
    %s36 = sphi 0, %s33
    %s37 = sphi 0, %s36
    %s53 = sphi 0, %s37
    %s57 = sphi 0, %s57
    %s59 = sphi 0, %s57
    %s60 = sphi 0, %s59
    %s74 = sphi 0, %s60
    %s80 = sphi 0, %s82
    %s83 = sphi 0, %s80
    %s84 = sphi 0, %s83
    %s100 = sphi 0, %s84
    %s108 = sphi 0, %s110
    %s111 = sphi 0, %s108
    %s112 = sphi 0, %s111
    %s128 = sphi 0, %s112
  $region4: #{vl_concat_forward.4} parent=0 // loop_header_branch
    %12 = sbr.rel (%p10) target = $region8
  $region5: #{vl_concat_forward.4} parent=0 // loop_body
    %s14 = ssub.s32 %s9, 1
    %s15 = ssub.s32 %s9, 2
    %s22 = sadd.s32 1, %s17
    %p23 = scmp.ge.s32.totalorder %s22, 1
    %s24 = scalar_select %p23, 0, %s22
    %s25 = sadd.s32 1, %s16
    %s26 = scalar_select %p23, %s25, %s16
    %p27 = scmp.ge.s32.totalorder %s26, 2
    %s28 = scalar_select %p27, 0, %s26
    %s29 = ssub.s32 %s16, %s28
    %s30 = ssub.s32 %s17, %s24
    %s31 = sor.u32 %s29, %s30
    %p32 = scmp.eq.s32.totalorder %s31, 0
    %s34 = sadd.s32 %s33, 1
    %s35 = scalar_select %p32, %s33, %s34
    %p38 = pneg %p32
    %p39 = scmp.eq.s32.totalorder %s9, 1
    %p40 = por %p38, %p39
    %p41 = scmp.ne.s32.totalorder %s33, %s36
    %p42 = scmp.eq.s32.totalorder %s9, 0
    %p43 = por %p41, %p42
    %p44 = scmp.ne.s32.totalorder %s33, %s36
    %p45 = scmp.eq.s32.totalorder %s14, 1
    %p46 = por %p44, %p45
    %p47 = scmp.ne.s32.totalorder %s36, %s37
    %p48 = scmp.eq.s32.totalorder %s14, 0
    %p49 = por %p47, %p48
    %p50 = scmp.ne.s32.totalorder %s36, %s37
    %p51 = scmp.eq.s32.totalorder %s15, 1
    %p52 = por %p50, %p51
    %p54 = scmp.ne.s32.totalorder %s37, %s53
    %p55 = scmp.eq.s32.totalorder %s15, 0
    %p56 = por %p54, %p55
    %s58 = sadd.s32 %s57, 1
    %p61 = scmp.eq.s32.totalorder %s9, 1
    %p62 = scmp.ne.s32.totalorder %s57, %s59
    %p63 = scmp.eq.s32.totalorder %s9, 0
    %p64 = por %p62, %p63
    %p65 = scmp.ne.s32.totalorder %s57, %s59
    %p66 = scmp.eq.s32.totalorder %s14, 1
    %p67 = por %p65, %p66
    %p68 = scmp.ne.s32.totalorder %s59, %s60
    %p69 = scmp.eq.s32.totalorder %s14, 0
    %p70 = por %p68, %p69
    %p71 = scmp.ne.s32.totalorder %s59, %s60
    %p72 = scmp.eq.s32.totalorder %s15, 1
    %p73 = por %p71, %p72
    %p75 = scmp.ne.s32.totalorder %s60, %s74
    %p76 = scmp.eq.s32.totalorder %s15, 0
    %p77 = por %p75, %p76
    %s78 = ssub.s32 %s16, %s28
    %p79 = scmp.eq.s32.totalorder %s78, 0
    %s81 = sadd.s32 %s80, 1
    %s82 = scalar_select %p79, %s80, %s81
    %p85 = pneg %p79
    %p86 = scmp.eq.s32.totalorder %s9, 1
    %p87 = por %p85, %p86
    %p88 = scmp.ne.s32.totalorder %s80, %s83
    %p89 = scmp.eq.s32.totalorder %s9, 0
    %p90 = por %p88, %p89
    %p91 = scmp.ne.s32.totalorder %s80, %s83
    %p92 = scmp.eq.s32.totalorder %s14, 1
    %p93 = por %p91, %p92
    %p94 = scmp.ne.s32.totalorder %s83, %s84
    %p95 = scmp.eq.s32.totalorder %s14, 0
    %p96 = por %p94, %p95
    %p97 = scmp.ne.s32.totalorder %s83, %s84
    %p98 = scmp.eq.s32.totalorder %s15, 1
    %p99 = por %p97, %p98
    %p101 = scmp.ne.s32.totalorder %s84, %s100
    %p102 = scmp.eq.s32.totalorder %s15, 0
    %p103 = por %p101, %p102
    %s104 = ssub.s32 %s16, %s28
    %s105 = ssub.s32 %s17, %s24
    %s106 = sor.u32 %s104, %s105
    %p107 = scmp.eq.s32.totalorder %s106, 0
    %s109 = sadd.s32 %s108, 1
    %s110 = scalar_select %p107, %s108, %s109
    %p113 = pneg %p107
    %p114 = scmp.eq.s32.totalorder %s9, 1
    %p115 = por %p113, %p114
    %p116 = scmp.ne.s32.totalorder %s108, %s111
    %p117 = scmp.eq.s32.totalorder %s9, 0
    %p118 = por %p116, %p117
    %p119 = scmp.ne.s32.totalorder %s108, %s111
    %p120 = scmp.eq.s32.totalorder %s14, 1
    %p121 = por %p119, %p120
    %p122 = scmp.ne.s32.totalorder %s111, %s112
    %p123 = scmp.eq.s32.totalorder %s14, 0
    %p124 = por %p122, %p123
    %p125 = scmp.ne.s32.totalorder %s111, %s112
    %p126 = scmp.eq.s32.totalorder %s15, 1
    %p127 = por %p125, %p126
    %p129 = scmp.ne.s32.totalorder %s112, %s128
    %p130 = scmp.eq.s32.totalorder %s15, 0
    %p131 = por %p129, %p130
    %p132 = scmp.le.s32.totalorder 1, %s9
    %p133 = scmp.lt.s32.totalorder %s9, 3
    %p134 = pnand %p132, %p133
    %p135 = pneg %p134
    // Predicated region
    $region9: #{vl_concat_forward.4} parent=5 // pred_check
      _
    $region10: #{vl_concat_forward.4} parent=5 // pred_check_branch
      %137 = sbr.rel (%p134) target = $region12
    $region11: #{vl_concat_forward.4} parent=5 // pred_region
      %s138 = ssub.s32 %s9, 1
      // Predicated region
      $region13: #{vl_concat_forward.4} parent=11 // pred_check
        %p139 = pneg %p70
      $region14: #{vl_concat_forward.4} parent=11 // pred_check_branch
        %141 = sbr.rel (%p139) target = $region16
      $region15: #{vl_concat_forward.4} parent=11 // pred_region
        _
      $region16: #{vl_concat_forward.4} parent=11 // pred_fallthru
        _
    $region12: #{vl_concat_forward.4} parent=5 // pred_fallthru
      _
    %p142 = scmp.lt.s32.totalorder %s9, 2
    // Predicated region
    $region17: #{vl_concat_forward.4} parent=5 // pred_check
      %p143 = pneg %p142
    $region18: #{vl_concat_forward.4} parent=5 // pred_check_branch
      %145 = sbr.rel (%p143) target = $region20
    $region19: #{vl_concat_forward.4} parent=5 // pred_region
      // Predicated region
      $region21: #{vl_concat_forward.4} parent=19 // pred_check
        %p146 = pneg %p43
      $region22: #{vl_concat_forward.4} parent=19 // pred_check_branch
        %148 = sbr.rel (%p146) target = $region24
      $region23: #{vl_concat_forward.4} parent=19 // pred_region
        %p149 = scmp.lt.s32.totalorder %s16, 1
        %s150 = scalar_select %p149, %s16, 1
        %p151 = scmp.lt.s32.totalorder %s17, 0
        %s152 = scalar_select %p151, %s17, 0
        %s153 = smul.addr %s150, 2
        %s154 = sadd.s32 %s152, %s153
        %s155 = smul.addr %s154, 8
        %s156 = scalar_lea.vmem %s0, %s155
      $region24: #{vl_concat_forward.4} parent=19 // pred_fallthru
        _
      // Predicated region
      $region25: #{vl_concat_forward.4} parent=19 // pred_check
        %p157 = pneg %p90
      $region26: #{vl_concat_forward.4} parent=19 // pred_check_branch
        %159 = sbr.rel (%p157) target = $region28
      $region27: #{vl_concat_forward.4} parent=19 // pred_region
        %p160 = scmp.lt.s32.totalorder %s16, 1
        %s161 = scalar_select %p160, %s16, 1
        %s162 = smul.addr %s161, 2
        %s163 = smul.addr %s162, 8
        %s164 = scalar_lea.vmem %s2, %s163
      $region28: #{vl_concat_forward.4} parent=19 // pred_fallthru
        _
    $region20: #{vl_concat_forward.4} parent=5 // pred_fallthru
      _
    %p165 = scmp.le.s32.totalorder 1, %s9
    %p166 = scmp.lt.s32.totalorder %s9, 3
    %p167 = pnand %p165, %p166
    %p168 = pneg %p167
    // Predicated region
    $region29: #{vl_concat_forward.4} parent=5 // pred_check
      _
    $region30: #{vl_concat_forward.4} parent=5 // pred_check_branch
      %170 = sbr.rel (%p167) target = $region32
    $region31: #{vl_concat_forward.4} parent=5 // pred_region
      %s171 = ssub.s32 %s9, 1
      %p172 = scmp.lt.s32.totalorder %s18, 1
      %s173 = scalar_select %p172, %s18, 1
      %p174 = scmp.lt.s32.totalorder %s19, 0
      %s175 = scalar_select %p174, %s19, 0
      %s176 = smul.addr %s173, 2
      %s177 = sadd.s32 %s175, %s176
      %s178 = smul.addr %s177, 8
      %s179 = scalar_lea.vmem %s0, %s178
      %p180 = pneg %p49
      %p181 = pneg %p46
      %p182 = pneg %p70
      %p183 = pneg %p67
      %p184 = scmp.lt.s32.totalorder %s18, 1
      %s185 = scalar_select %p184, %s18, 1
      %s186 = smul.addr %s185, 2
      %s187 = smul.addr %s186, 8
      %s188 = scalar_lea.vmem %s2, %s187
      %p189 = pneg %p96
      %p190 = pneg %p93
      %p191 = pneg %p124
      %p192 = pneg %p121
      %p193 = scmp.lt.s32.totalorder %s18, 1
      %s194 = scalar_select %p193, %s18, 1
      %p195 = scmp.lt.s32.totalorder %s19, 0
      %s196 = scalar_select %p195, %s19, 0
      %s197 = smul.addr %s194, 2
      %s198 = sadd.s32 %s196, %s197
      %s199 = smul.addr %s198, 8
      %s200 = scalar_lea.vmem %s3, %s199
      %p201 = scmp.lt.s32.totalorder %s18, 1
      %s202 = scalar_select %p201, %s18, 1
      %p203 = scmp.lt.s32.totalorder %s19, 0
      %s204 = scalar_select %p203, %s19, 0
      %s205 = smul.addr %s202, 2
      %s206 = sadd.s32 %s204, %s205
      %s207 = smul.addr %s206, 8
      %s208 = scalar_lea.vmem %s0, %s207
      %p209 = scmp.lt.s32.totalorder %s18, 1
      %s210 = scalar_select %p209, %s18, 1
      %s211 = smul.addr %s210, 2
      %s212 = smul.addr %s211, 8
      %s213 = scalar_lea.vmem %s2, %s212
      %p214 = scmp.lt.s32.totalorder %s18, 1
      %s215 = scalar_select %p214, %s18, 1
      %p216 = scmp.lt.s32.totalorder %s19, 0
      %s217 = scalar_select %p216, %s19, 0
      %s218 = smul.addr %s215, 2
      %s219 = sadd.s32 %s217, %s218
      %s220 = smul.addr %s219, 8
      %s221 = scalar_lea.vmem %s3, %s220
      %v222 = vld [vmem:[%s1] sm:$0xff]
      %v223 = vld [vmem:[%s1 + $0x8] sm:$0xff]
      %v224 = vld [vmem:[%s208] sm:$0xff]
      %v225 = vld [vmem:[%s208 + $0x8] sm:$0xff]
      %v226 = vld [vmem:[%s213] sm:$0xff]
      %v227 = vld [vmem:[%s213 + $0x8] sm:$0xff]
      %229 = vset.pattern.permute.xlu0 0
      %230 = vperm.xlu0 %229, %v226
      %v231 = vpop.permute.xlu0 %230
      %234 = vset.pattern.permute.xlu0 0
      %235 = vperm.xlu0 %234, %v227
      %v236 = vpop.permute.xlu0 %235
      %vm238 = vcmask 130048
      %v240 = vsel %vm238, %v222, 0
      %v243 = vsel %vm238, %v223, 0
      %245 = vmatprep.subr.mxu0 0.0
      %246 = vmatpush1.msra.mxu0 %v224
      %247 = vmatprep.subr.mxu0 0.0
      %248 = vmatpush1.msra.mxu0 %v225
      %249 = vmatprep.subr.mxu0 0.0
      %250 = vmatpush1.msra.mxu0 0.0
      %251 = vmatprep.subr.mxu0 0.0
      %252 = vmatpush1.msra.mxu0 0.0
      %253 = vmatprep.subr.mxu0 0.0
      %254 = vmatpush1.msra.mxu0 0.0
      %255 = vmatprep.subr.mxu0 0.0
      %256 = vmatpush1.msra.mxu0 0.0
      %257 = vmatprep.subr.mxu0 0.0
      %258 = vmatpush1.msra.mxu0 0.0
      %259 = vmatprep.subr.mxu0 0.0
      %260 = vmatpush1.msra.mxu0 0.0
      %261 = vmatprep.subr.mxu0 0.0
      %262 = vmatpush1.msra.mxu0 0.0
      %263 = vmatprep.subr.mxu0 0.0
      %264 = vmatpush1.msra.mxu0 0.0
      %265 = vmatprep.subr.mxu0 0.0
      %266 = vmatpush1.msra.mxu0 0.0
      %267 = vmatprep.subr.mxu0 0.0
      %268 = vmatpush1.msra.mxu0 0.0
      %269 = vmatprep.subr.mxu0 0.0
      %270 = vmatpush1.msra.mxu0 0.0
      %271 = vmatprep.subr.mxu0 0.0
      %272 = vmatpush1.msra.mxu0 0.0
      %273 = vmatprep.subr.mxu0 0.0
      %274 = vmatpush1.msra.mxu0 0.0
      %275 = vmatprep.subr.mxu0 0.0
      %276 = vmatpush1.msra.mxu0 0.0
      %277 = vmatprep.subr.mxu0 0.0
      %278 = vmatpush1.msra.mxu0 0.0
      %279 = vmatprep.subr.mxu0 0.0
      %280 = vmatpush1.msra.mxu0 0.0
      %281 = vmatprep.subr.mxu0 0.0
      %282 = vmatpush1.msra.mxu0 0.0
      %283 = vmatprep.subr.mxu0 0.0
      %284 = vmatpush1.msra.mxu0 0.0
      %285 = vmatprep.subr.mxu0 0.0
      %286 = vmatpush1.msra.mxu0 0.0
      %287 = vmatprep.subr.mxu0 0.0
      %288 = vmatpush1.msra.mxu0 0.0
      %289 = vmatprep.subr.mxu0 0.0
      %290 = vmatpush1.msra.mxu0 0.0
      %291 = vmatprep.subr.mxu0 0.0
      %292 = vmatpush1.msra.mxu0 0.0
      %293 = vmatprep.subr.mxu0 0.0
      %294 = vmatpush1.msra.mxu0 0.0
      %295 = vmatprep.subr.mxu0 0.0
      %296 = vmatpush1.msra.mxu0 0.0
      %297 = vmatprep.subr.mxu0 0.0
      %298 = vmatpush1.msra.mxu0 0.0
      %299 = vmatprep.subr.mxu0 0.0
      %300 = vmatpush1.msra.mxu0 0.0
      %301 = vmatprep.subr.mxu0 0.0
      %302 = vmatpush1.msra.mxu0 0.0
      %303 = vmatprep.subr.mxu0 0.0
      %304 = vmatpush1.msra.mxu0 0.0
      %305 = vmatprep.subr.mxu0 0.0
      %306 = vmatpush1.msra.mxu0 0.0
      %307 = vmatprep.subr.mxu0 0.0
      %308 = vmatpush1.msra.mxu0 0.0
      %309 = vmatprep.mubr.f32.mxu0 0.0
      %310 = vmatmul.mubr.f32.gmra.mrb[0].mxu0 %v240
      %v311 = vpop.f32.mrb[0].mxu0
      %v312 = vadd.f32 %v231, %v311
      %v313 = vpop.f32.mrb[0].mxu0
      %314 = vmatprep.mubr.f32.mxu0 0.0
      %315 = vmatmul.mubr.f32.gmra.mrb[0].mxu0 %v243
      %v316 = vpop.f32.mrb[0].mxu0
      %v317 = vadd.f32 %v236, %v316
      %v318 = vpop.f32.mrb[0].mxu0
      %319 = vdwg.mxu0
      %vm320 = vcmask 523264
      %321 = vst.msk [vmem:[%s221] sm:$0xff] %vm320, %v312
      %322 = vst.msk [vmem:[%s221 + $0x8] sm:$0xff] %vm320, %v317
      %p323 = scmp.lt.s32.totalorder %s18, 1
      %s324 = scalar_select %p323, %s18, 1
      %p325 = scmp.lt.s32.totalorder %s19, 0
      %s326 = scalar_select %p325, %s19, 0
      %s327 = smul.addr %s324, 2
      %s328 = sadd.s32 %s326, %s327
      %s329 = smul.addr %s328, 8
      %s330 = scalar_lea.vmem %s3, %s329
      // Predicated region
      $region33: #{vl_concat_forward.4} parent=31 // pred_check
        %p331 = pneg %p121
      $region34: #{vl_concat_forward.4} parent=31 // pred_check_branch
        %333 = sbr.rel (%p331) target = $region36
      $region35: #{vl_concat_forward.4} parent=31 // pred_region
        _
      $region36: #{vl_concat_forward.4} parent=31 // pred_fallthru
        _
    $region32: #{vl_concat_forward.4} parent=5 // pred_fallthru
      _
    %p334 = scmp.le.s32.totalorder 2, %s9
    // Predicated region
    $region37: #{vl_concat_forward.4} parent=5 // pred_check
      %p335 = pneg %p334
    $region38: #{vl_concat_forward.4} parent=5 // pred_check_branch
      %337 = sbr.rel (%p335) target = $region40
    $region39: #{vl_concat_forward.4} parent=5 // pred_region
      %s338 = ssub.s32 %s9, 2
      // Predicated region
      $region41: #{vl_concat_forward.4} parent=39 // pred_check
        %p339 = pneg %p127
      $region42: #{vl_concat_forward.4} parent=39 // pred_check_branch
        %341 = sbr.rel (%p339) target = $region44
      $region43: #{vl_concat_forward.4} parent=39 // pred_region
        %p342 = scmp.lt.s32.totalorder %s20, 1
        %s343 = scalar_select %p342, %s20, 1
        %p344 = scmp.lt.s32.totalorder %s21, 0
        %s345 = scalar_select %p344, %s21, 0
        %s346 = smul.addr %s343, 2
        %s347 = sadd.s32 %s345, %s346
        %s348 = smul.addr %s347, 8
        %s349 = scalar_lea.vmem %s3, %s348
      $region44: #{vl_concat_forward.4} parent=39 // pred_fallthru
        _
    $region40: #{vl_concat_forward.4} parent=5 // pred_fallthru
      _
  $region6: #{vl_concat_forward.4} parent=0 // loop_footer
    %s13 = sadd.s32 1, %s9
  $region7: #{vl_concat_forward.4} parent=0 // loop_footer_branch
    %8 = sbr.rel target = $region3
  $region8: #{vl_concat_forward.4} parent=0 // loop_exit
    _

// kernel: vl_concat_forward.5
$region0: #{vl_concat_forward.5}
  #allocation0 [shape = 'u32[]', space=smem, size = 0x4, offset = 0x4, fixed_abs, tag = 'smem constant byte address 0x4 - core index']
  #allocation1 [shape = 'u32[144,128]{1,0:T(1,128)}', space=vmem, size = 0x12000, scoped, tag = 'internal scratch']
  %s0 = inlined_call_operand.vmem [shape: f32[2,16,16], index: 0, kind: input, shape index: {}]
  %s1 = inlined_call_operand.vmem [shape: f32[16,16], index: 1, kind: input, shape index: {}]
  %s2 = inlined_call_operand.vmem [shape: f32[2,16,1], index: 2, kind: input, shape index: {}]
  %s3 = inlined_call_operand.vmem [shape: f32[2,16,16], index: 3, kind: output, shape index: {}]
  %s4 = sld [smem:[#allocation0]]
  $region45: #{vl_concat_forward.5} parent=0
    _
  %s6 = ssub.s32 1, %s4
  %s7 = scalar_select 0, %s6, %s4
  loop: start=0, step=1, limit=4
  $region2: #{vl_concat_forward.5} parent=0 // loop_pre_header
    _
  $region3: #{vl_concat_forward.5} parent=0 // loop_header
    %s9 = sphi 0, %s13
    %p10 = scmp.ge.s32.totalorder %s9, 4
    %s16 = sphi 0, %s28
    %s17 = sphi 0, %s24
    %s18 = sphi 0, %s16
    %s19 = sphi 0, %s17
    %s20 = sphi 0, %s18
    %s21 = sphi 0, %s19
    %s33 = sphi 0, %s35
    %s36 = sphi 0, %s33
    %s37 = sphi 0, %s36
    %s53 = sphi 0, %s37
    %s57 = sphi 0, %s57
    %s59 = sphi 0, %s57
    %s60 = sphi 0, %s59
    %s74 = sphi 0, %s60
    %s80 = sphi 0, %s82
    %s83 = sphi 0, %s80
    %s84 = sphi 0, %s83
    %s100 = sphi 0, %s84
    %s108 = sphi 0, %s110
    %s111 = sphi 0, %s108
    %s112 = sphi 0, %s111
    %s128 = sphi 0, %s112
  $region4: #{vl_concat_forward.5} parent=0 // loop_header_branch
    %12 = sbr.rel (%p10) target = $region8
  $region5: #{vl_concat_forward.5} parent=0 // loop_body
    %s14 = ssub.s32 %s9, 1
    %s15 = ssub.s32 %s9, 2
    %s22 = sadd.s32 1, %s17
    %p23 = scmp.ge.s32.totalorder %s22, 1
    %s24 = scalar_select %p23, 0, %s22
    %s25 = sadd.s32 1, %s16
    %s26 = scalar_select %p23, %s25, %s16
    %p27 = scmp.ge.s32.totalorder %s26, 2
    %s28 = scalar_select %p27, 0, %s26
    %s29 = ssub.s32 %s16, %s28
    %s30 = ssub.s32 %s17, %s24
    %s31 = sor.u32 %s29, %s30
    %p32 = scmp.eq.s32.totalorder %s31, 0
    %s34 = sadd.s32 %s33, 1
    %s35 = scalar_select %p32, %s33, %s34
    %p38 = pneg %p32
    %p39 = scmp.eq.s32.totalorder %s9, 1
    %p40 = por %p38, %p39
    %p41 = scmp.ne.s32.totalorder %s33, %s36
    %p42 = scmp.eq.s32.totalorder %s9, 0
    %p43 = por %p41, %p42
    %p44 = scmp.ne.s32.totalorder %s33, %s36
    %p45 = scmp.eq.s32.totalorder %s14, 1
    %p46 = por %p44, %p45
    %p47 = scmp.ne.s32.totalorder %s36, %s37
    %p48 = scmp.eq.s32.totalorder %s14, 0
    %p49 = por %p47, %p48
    %p50 = scmp.ne.s32.totalorder %s36, %s37
    %p51 = scmp.eq.s32.totalorder %s15, 1
    %p52 = por %p50, %p51
    %p54 = scmp.ne.s32.totalorder %s37, %s53
    %p55 = scmp.eq.s32.totalorder %s15, 0
    %p56 = por %p54, %p55
    %s58 = sadd.s32 %s57, 1
    %p61 = scmp.eq.s32.totalorder %s9, 1
    %p62 = scmp.ne.s32.totalorder %s57, %s59
    %p63 = scmp.eq.s32.totalorder %s9, 0
    %p64 = por %p62, %p63
    %p65 = scmp.ne.s32.totalorder %s57, %s59
    %p66 = scmp.eq.s32.totalorder %s14, 1
    %p67 = por %p65, %p66
    %p68 = scmp.ne.s32.totalorder %s59, %s60
    %p69 = scmp.eq.s32.totalorder %s14, 0
    %p70 = por %p68, %p69
    %p71 = scmp.ne.s32.totalorder %s59, %s60
    %p72 = scmp.eq.s32.totalorder %s15, 1
    %p73 = por %p71, %p72
    %p75 = scmp.ne.s32.totalorder %s60, %s74
    %p76 = scmp.eq.s32.totalorder %s15, 0
    %p77 = por %p75, %p76
    %s78 = ssub.s32 %s16, %s28
    %p79 = scmp.eq.s32.totalorder %s78, 0
    %s81 = sadd.s32 %s80, 1
    %s82 = scalar_select %p79, %s80, %s81
    %p85 = pneg %p79
    %p86 = scmp.eq.s32.totalorder %s9, 1
    %p87 = por %p85, %p86
    %p88 = scmp.ne.s32.totalorder %s80, %s83
    %p89 = scmp.eq.s32.totalorder %s9, 0
    %p90 = por %p88, %p89
    %p91 = scmp.ne.s32.totalorder %s80, %s83
    %p92 = scmp.eq.s32.totalorder %s14, 1
    %p93 = por %p91, %p92
    %p94 = scmp.ne.s32.totalorder %s83, %s84
    %p95 = scmp.eq.s32.totalorder %s14, 0
    %p96 = por %p94, %p95
    %p97 = scmp.ne.s32.totalorder %s83, %s84
    %p98 = scmp.eq.s32.totalorder %s15, 1
    %p99 = por %p97, %p98
    %p101 = scmp.ne.s32.totalorder %s84, %s100
    %p102 = scmp.eq.s32.totalorder %s15, 0
    %p103 = por %p101, %p102
    %s104 = ssub.s32 %s16, %s28
    %s105 = ssub.s32 %s17, %s24
    %s106 = sor.u32 %s104, %s105
    %p107 = scmp.eq.s32.totalorder %s106, 0
    %s109 = sadd.s32 %s108, 1
    %s110 = scalar_select %p107, %s108, %s109
    %p113 = pneg %p107
    %p114 = scmp.eq.s32.totalorder %s9, 1
    %p115 = por %p113, %p114
    %p116 = scmp.ne.s32.totalorder %s108, %s111
    %p117 = scmp.eq.s32.totalorder %s9, 0
    %p118 = por %p116, %p117
    %p119 = scmp.ne.s32.totalorder %s108, %s111
    %p120 = scmp.eq.s32.totalorder %s14, 1
    %p121 = por %p119, %p120
    %p122 = scmp.ne.s32.totalorder %s111, %s112
    %p123 = scmp.eq.s32.totalorder %s14, 0
    %p124 = por %p122, %p123
    %p125 = scmp.ne.s32.totalorder %s111, %s112
    %p126 = scmp.eq.s32.totalorder %s15, 1
    %p127 = por %p125, %p126
    %p129 = scmp.ne.s32.totalorder %s112, %s128
    %p130 = scmp.eq.s32.totalorder %s15, 0
    %p131 = por %p129, %p130
    %p132 = scmp.le.s32.totalorder 1, %s9
    %p133 = scmp.lt.s32.totalorder %s9, 3
    %p134 = pnand %p132, %p133
    %p135 = pneg %p134
    // Predicated region
    $region9: #{vl_concat_forward.5} parent=5 // pred_check
      _
    $region10: #{vl_concat_forward.5} parent=5 // pred_check_branch
      %137 = sbr.rel (%p134) target = $region12
    $region11: #{vl_concat_forward.5} parent=5 // pred_region
      %s138 = ssub.s32 %s9, 1
      // Predicated region
      $region13: #{vl_concat_forward.5} parent=11 // pred_check
        %p139 = pneg %p70
      $region14: #{vl_concat_forward.5} parent=11 // pred_check_branch
        %141 = sbr.rel (%p139) target = $region16
      $region15: #{vl_concat_forward.5} parent=11 // pred_region
        _
      $region16: #{vl_concat_forward.5} parent=11 // pred_fallthru
        _
    $region12: #{vl_concat_forward.5} parent=5 // pred_fallthru
      _
    %p142 = scmp.lt.s32.totalorder %s9, 2
    // Predicated region
    $region17: #{vl_concat_forward.5} parent=5 // pred_check
      %p143 = pneg %p142
    $region18: #{vl_concat_forward.5} parent=5 // pred_check_branch
      %145 = sbr.rel (%p143) target = $region20
    $region19: #{vl_concat_forward.5} parent=5 // pred_region
      // Predicated region
      $region21: #{vl_concat_forward.5} parent=19 // pred_check
        %p146 = pneg %p43
      $region22: #{vl_concat_forward.5} parent=19 // pred_check_branch
        %148 = sbr.rel (%p146) target = $region24
      $region23: #{vl_concat_forward.5} parent=19 // pred_region
        %p149 = scmp.lt.s32.totalorder %s16, 1
        %s150 = scalar_select %p149, %s16, 1
        %p151 = scmp.lt.s32.totalorder %s17, 0
        %s152 = scalar_select %p151, %s17, 0
        %s153 = smul.addr %s150, 2
        %s154 = sadd.s32 %s152, %s153
        %s155 = smul.addr %s154, 8
        %s156 = scalar_lea.vmem %s0, %s155
      $region24: #{vl_concat_forward.5} parent=19 // pred_fallthru
        _
      // Predicated region
      $region25: #{vl_concat_forward.5} parent=19 // pred_check
        %p157 = pneg %p90
      $region26: #{vl_concat_forward.5} parent=19 // pred_check_branch
        %159 = sbr.rel (%p157) target = $region28
      $region27: #{vl_concat_forward.5} parent=19 // pred_region
        %p160 = scmp.lt.s32.totalorder %s16, 1
        %s161 = scalar_select %p160, %s16, 1
        %s162 = smul.addr %s161, 2
        %s163 = smul.addr %s162, 8
        %s164 = scalar_lea.vmem %s2, %s163
      $region28: #{vl_concat_forward.5} parent=19 // pred_fallthru
        _
    $region20: #{vl_concat_forward.5} parent=5 // pred_fallthru
      _
    %p165 = scmp.le.s32.totalorder 1, %s9
    %p166 = scmp.lt.s32.totalorder %s9, 3
    %p167 = pnand %p165, %p166
    %p168 = pneg %p167
    // Predicated region
    $region29: #{vl_concat_forward.5} parent=5 // pred_check
      _
    $region30: #{vl_concat_forward.5} parent=5 // pred_check_branch
      %170 = sbr.rel (%p167) target = $region32
    $region31: #{vl_concat_forward.5} parent=5 // pred_region
      %s171 = ssub.s32 %s9, 1
      %p172 = scmp.lt.s32.totalorder %s18, 1
      %s173 = scalar_select %p172, %s18, 1
      %p174 = scmp.lt.s32.totalorder %s19, 0
      %s175 = scalar_select %p174, %s19, 0
      %s176 = smul.addr %s173, 2
      %s177 = sadd.s32 %s175, %s176
      %s178 = smul.addr %s177, 8
      %s179 = scalar_lea.vmem %s0, %s178
      %p180 = pneg %p49
      %p181 = pneg %p46
      %p182 = pneg %p70
      %p183 = pneg %p67
      %p184 = scmp.lt.s32.totalorder %s18, 1
      %s185 = scalar_select %p184, %s18, 1
      %s186 = smul.addr %s185, 2
      %s187 = smul.addr %s186, 8
      %s188 = scalar_lea.vmem %s2, %s187
      %p189 = pneg %p96
      %p190 = pneg %p93
      %p191 = pneg %p124
      %p192 = pneg %p121
      %p193 = scmp.lt.s32.totalorder %s18, 1
      %s194 = scalar_select %p193, %s18, 1
      %p195 = scmp.lt.s32.totalorder %s19, 0
      %s196 = scalar_select %p195, %s19, 0
      %s197 = smul.addr %s194, 2
      %s198 = sadd.s32 %s196, %s197
      %s199 = smul.addr %s198, 8
      %s200 = scalar_lea.vmem %s3, %s199
      %p201 = scmp.lt.s32.totalorder %s18, 1
      %s202 = scalar_select %p201, %s18, 1
      %p203 = scmp.lt.s32.totalorder %s19, 0
      %s204 = scalar_select %p203, %s19, 0
      %s205 = smul.addr %s202, 2
      %s206 = sadd.s32 %s204, %s205
      %s207 = smul.addr %s206, 8
      %s208 = scalar_lea.vmem %s0, %s207
      %p209 = scmp.lt.s32.totalorder %s18, 1
      %s210 = scalar_select %p209, %s18, 1
      %s211 = smul.addr %s210, 2
      %s212 = smul.addr %s211, 8
      %s213 = scalar_lea.vmem %s2, %s212
      %p214 = scmp.lt.s32.totalorder %s18, 1
      %s215 = scalar_select %p214, %s18, 1
      %p216 = scmp.lt.s32.totalorder %s19, 0
      %s217 = scalar_select %p216, %s19, 0
      %s218 = smul.addr %s215, 2
      %s219 = sadd.s32 %s217, %s218
      %s220 = smul.addr %s219, 8
      %s221 = scalar_lea.vmem %s3, %s220
      %v222 = vld [vmem:[%s1] sm:$0xff]
      %v223 = vld [vmem:[%s1 + $0x8] sm:$0xff]
      %v224 = vld [vmem:[%s208] sm:$0xff]
      %v225 = vld [vmem:[%s208 + $0x8] sm:$0xff]
      %v226 = vld [vmem:[%s213] sm:$0xff]
      %v227 = vld [vmem:[%s213 + $0x8] sm:$0xff]
      %229 = vset.pattern.permute.xlu0 0
      %230 = vperm.xlu0 %229, %v226
      %v231 = vpop.permute.xlu0 %230
      %234 = vset.pattern.permute.xlu0 0
      %235 = vperm.xlu0 %234, %v227
      %v236 = vpop.permute.xlu0 %235
      %vm238 = vcmask 130048
      %v240 = vsel %vm238, %v222, 0
      %v243 = vsel %vm238, %v223, 0
      %245 = vmatprep.subr.mxu0 0.0
      %246 = vmatpush1.msra.mxu0 %v224
      %247 = vmatprep.subr.mxu0 0.0
      %248 = vmatpush1.msra.mxu0 %v225
      %249 = vmatprep.subr.mxu0 0.0
      %250 = vmatpush1.msra.mxu0 0.0
      %251 = vmatprep.subr.mxu0 0.0
      %252 = vmatpush1.msra.mxu0 0.0
      %253 = vmatprep.subr.mxu0 0.0
      %254 = vmatpush1.msra.mxu0 0.0
      %255 = vmatprep.subr.mxu0 0.0
      %256 = vmatpush1.msra.mxu0 0.0
      %257 = vmatprep.subr.mxu0 0.0
      %258 = vmatpush1.msra.mxu0 0.0
      %259 = vmatprep.subr.mxu0 0.0
      %260 = vmatpush1.msra.mxu0 0.0
      %261 = vmatprep.subr.mxu0 0.0
      %262 = vmatpush1.msra.mxu0 0.0
      %263 = vmatprep.subr.mxu0 0.0
      %264 = vmatpush1.msra.mxu0 0.0
      %265 = vmatprep.subr.mxu0 0.0
      %266 = vmatpush1.msra.mxu0 0.0
      %267 = vmatprep.subr.mxu0 0.0
      %268 = vmatpush1.msra.mxu0 0.0
      %269 = vmatprep.subr.mxu0 0.0
      %270 = vmatpush1.msra.mxu0 0.0
      %271 = vmatprep.subr.mxu0 0.0
      %272 = vmatpush1.msra.mxu0 0.0
      %273 = vmatprep.subr.mxu0 0.0
      %274 = vmatpush1.msra.mxu0 0.0
      %275 = vmatprep.subr.mxu0 0.0
      %276 = vmatpush1.msra.mxu0 0.0
      %277 = vmatprep.subr.mxu0 0.0
      %278 = vmatpush1.msra.mxu0 0.0
      %279 = vmatprep.subr.mxu0 0.0
      %280 = vmatpush1.msra.mxu0 0.0
      %281 = vmatprep.subr.mxu0 0.0
      %282 = vmatpush1.msra.mxu0 0.0
      %283 = vmatprep.subr.mxu0 0.0
      %284 = vmatpush1.msra.mxu0 0.0
      %285 = vmatprep.subr.mxu0 0.0
      %286 = vmatpush1.msra.mxu0 0.0
      %287 = vmatprep.subr.mxu0 0.0
      %288 = vmatpush1.msra.mxu0 0.0
      %289 = vmatprep.subr.mxu0 0.0
      %290 = vmatpush1.msra.mxu0 0.0
      %291 = vmatprep.subr.mxu0 0.0
      %292 = vmatpush1.msra.mxu0 0.0
      %293 = vmatprep.subr.mxu0 0.0
      %294 = vmatpush1.msra.mxu0 0.0
      %295 = vmatprep.subr.mxu0 0.0
      %296 = vmatpush1.msra.mxu0 0.0
      %297 = vmatprep.subr.mxu0 0.0
      %298 = vmatpush1.msra.mxu0 0.0
      %299 = vmatprep.subr.mxu0 0.0
      %300 = vmatpush1.msra.mxu0 0.0
      %301 = vmatprep.subr.mxu0 0.0
      %302 = vmatpush1.msra.mxu0 0.0
      %303 = vmatprep.subr.mxu0 0.0
      %304 = vmatpush1.msra.mxu0 0.0
      %305 = vmatprep.subr.mxu0 0.0
      %306 = vmatpush1.msra.mxu0 0.0
      %307 = vmatprep.subr.mxu0 0.0
      %308 = vmatpush1.msra.mxu0 0.0
      %309 = vmatprep.mubr.f32.mxu0 0.0
      %310 = vmatmul.mubr.f32.gmra.mrb[0].mxu0 %v240
      %v311 = vpop.f32.mrb[0].mxu0
      %v312 = vadd.f32 %v231, %v311
      %v313 = vpop.f32.mrb[0].mxu0
      %314 = vmatprep.mubr.f32.mxu0 0.0
      %315 = vmatmul.mubr.f32.gmra.mrb[0].mxu0 %v243
      %v316 = vpop.f32.mrb[0].mxu0
      %v317 = vadd.f32 %v236, %v316
      %v318 = vpop.f32.mrb[0].mxu0
      %319 = vdwg.mxu0
      %320 = vst.msk [vmem:[%s221] sm:$0xff] %vm238, %v312
      %321 = vst.msk [vmem:[%s221 + $0x8] sm:$0xff] %vm238, %v317
      %p322 = scmp.lt.s32.totalorder %s18, 1
      %s323 = scalar_select %p322, %s18, 1
      %p324 = scmp.lt.s32.totalorder %s19, 0
      %s325 = scalar_select %p324, %s19, 0
      %s326 = smul.addr %s323, 2
      %s327 = sadd.s32 %s325, %s326
      %s328 = smul.addr %s327, 8
      %s329 = scalar_lea.vmem %s3, %s328
      // Predicated region
      $region33: #{vl_concat_forward.5} parent=31 // pred_check
        %p330 = pneg %p121
      $region34: #{vl_concat_forward.5} parent=31 // pred_check_branch
        %332 = sbr.rel (%p330) target = $region36
      $region35: #{vl_concat_forward.5} parent=31 // pred_region
        _
      $region36: #{vl_concat_forward.5} parent=31 // pred_fallthru
        _
    $region32: #{vl_concat_forward.5} parent=5 // pred_fallthru
      _
    %p333 = scmp.le.s32.totalorder 2, %s9
    // Predicated region
    $region37: #{vl_concat_forward.5} parent=5 // pred_check
      %p334 = pneg %p333
    $region38: #{vl_concat_forward.5} parent=5 // pred_check_branch
      %336 = sbr.rel (%p334) target = $region40
    $region39: #{vl_concat_forward.5} parent=5 // pred_region
      %s337 = ssub.s32 %s9, 2
      // Predicated region
      $region41: #{vl_concat_forward.5} parent=39 // pred_check
        %p338 = pneg %p127
      $region42: #{vl_concat_forward.5} parent=39 // pred_check_branch
        %340 = sbr.rel (%p338) target = $region44
      $region43: #{vl_concat_forward.5} parent=39 // pred_region
        %p341 = scmp.lt.s32.totalorder %s20, 1
        %s342 = scalar_select %p341, %s20, 1
        %p343 = scmp.lt.s32.totalorder %s21, 0
        %s344 = scalar_select %p343, %s21, 0
        %s345 = smul.addr %s342, 2
        %s346 = sadd.s32 %s344, %s345
        %s347 = smul.addr %s346, 8
        %s348 = scalar_lea.vmem %s3, %s347
      $region44: #{vl_concat_forward.5} parent=39 // pred_fallthru
        _
    $region40: #{vl_concat_forward.5} parent=5 // pred_fallthru
      _
  $region6: #{vl_concat_forward.5} parent=0 // loop_footer
    %s13 = sadd.s32 1, %s9
  $region7: #{vl_concat_forward.5} parent=0 // loop_footer_branch
    %8 = sbr.rel target = $region3
  $region8: #{vl_concat_forward.5} parent=0 // loop_exit
    _

// kernel: vl_concat_forward.3
$region0: #{vl_concat_forward.3}
  #allocation0 [shape = 'u32[]', space=smem, size = 0x4, offset = 0x4, fixed_abs, tag = 'smem constant byte address 0x4 - core index']
  #allocation1 [shape = 'u32[144,128]{1,0:T(1,128)}', space=vmem, size = 0x12000, scoped, tag = 'internal scratch']
  %s0 = inlined_call_operand.vmem [shape: f32[2,16,256], index: 0, kind: input, shape index: {}]
  %s1 = inlined_call_operand.vmem [shape: f32[16,16], index: 1, kind: input, shape index: {}]
  %s2 = inlined_call_operand.vmem [shape: f32[2,16,1], index: 2, kind: input, shape index: {}]
  %s3 = inlined_call_operand.vmem [shape: f32[2,16,256], index: 3, kind: output, shape index: {}]
  %s4 = sld [smem:[#allocation0]]
  $region45: #{vl_concat_forward.3} parent=0
    _
  %s6 = ssub.s32 1, %s4
  %s7 = scalar_select 0, %s6, %s4
  loop: start=0, step=1, limit=4
  $region2: #{vl_concat_forward.3} parent=0 // loop_pre_header
    _
  $region3: #{vl_concat_forward.3} parent=0 // loop_header
    %s9 = sphi 0, %s13
    %p10 = scmp.ge.s32.totalorder %s9, 4
    %s16 = sphi 0, %s28
    %s17 = sphi 0, %s24
    %s18 = sphi 0, %s16
    %s19 = sphi 0, %s17
    %s20 = sphi 0, %s18
    %s21 = sphi 0, %s19
    %s33 = sphi 0, %s35
    %s36 = sphi 0, %s33
    %s37 = sphi 0, %s36
    %s53 = sphi 0, %s37
    %s57 = sphi 0, %s57
    %s59 = sphi 0, %s57
    %s60 = sphi 0, %s59
    %s74 = sphi 0, %s60
    %s80 = sphi 0, %s82
    %s83 = sphi 0, %s80
    %s84 = sphi 0, %s83
    %s100 = sphi 0, %s84
    %s108 = sphi 0, %s110
    %s111 = sphi 0, %s108
    %s112 = sphi 0, %s111
    %s128 = sphi 0, %s112
  $region4: #{vl_concat_forward.3} parent=0 // loop_header_branch
    %12 = sbr.rel (%p10) target = $region8
  $region5: #{vl_concat_forward.3} parent=0 // loop_body
    %s14 = ssub.s32 %s9, 1
    %s15 = ssub.s32 %s9, 2
    %s22 = sadd.s32 1, %s17
    %p23 = scmp.ge.s32.totalorder %s22, 1
    %s24 = scalar_select %p23, 0, %s22
    %s25 = sadd.s32 1, %s16
    %s26 = scalar_select %p23, %s25, %s16
    %p27 = scmp.ge.s32.totalorder %s26, 2
    %s28 = scalar_select %p27, 0, %s26
    %s29 = ssub.s32 %s16, %s28
    %s30 = ssub.s32 %s17, %s24
    %s31 = sor.u32 %s29, %s30
    %p32 = scmp.eq.s32.totalorder %s31, 0
    %s34 = sadd.s32 %s33, 1
    %s35 = scalar_select %p32, %s33, %s34
    %p38 = pneg %p32
    %p39 = scmp.eq.s32.totalorder %s9, 1
    %p40 = por %p38, %p39
    %p41 = scmp.ne.s32.totalorder %s33, %s36
    %p42 = scmp.eq.s32.totalorder %s9, 0
    %p43 = por %p41, %p42
    %p44 = scmp.ne.s32.totalorder %s33, %s36
    %p45 = scmp.eq.s32.totalorder %s14, 1
    %p46 = por %p44, %p45
    %p47 = scmp.ne.s32.totalorder %s36, %s37
    %p48 = scmp.eq.s32.totalorder %s14, 0
    %p49 = por %p47, %p48
    %p50 = scmp.ne.s32.totalorder %s36, %s37
    %p51 = scmp.eq.s32.totalorder %s15, 1
    %p52 = por %p50, %p51
    %p54 = scmp.ne.s32.totalorder %s37, %s53
    %p55 = scmp.eq.s32.totalorder %s15, 0
    %p56 = por %p54, %p55
    %s58 = sadd.s32 %s57, 1
    %p61 = scmp.eq.s32.totalorder %s9, 1
    %p62 = scmp.ne.s32.totalorder %s57, %s59
    %p63 = scmp.eq.s32.totalorder %s9, 0
    %p64 = por %p62, %p63
    %p65 = scmp.ne.s32.totalorder %s57, %s59
    %p66 = scmp.eq.s32.totalorder %s14, 1
    %p67 = por %p65, %p66
    %p68 = scmp.ne.s32.totalorder %s59, %s60
    %p69 = scmp.eq.s32.totalorder %s14, 0
    %p70 = por %p68, %p69
    %p71 = scmp.ne.s32.totalorder %s59, %s60
    %p72 = scmp.eq.s32.totalorder %s15, 1
    %p73 = por %p71, %p72
    %p75 = scmp.ne.s32.totalorder %s60, %s74
    %p76 = scmp.eq.s32.totalorder %s15, 0
    %p77 = por %p75, %p76
    %s78 = ssub.s32 %s16, %s28
    %p79 = scmp.eq.s32.totalorder %s78, 0
    %s81 = sadd.s32 %s80, 1
    %s82 = scalar_select %p79, %s80, %s81
    %p85 = pneg %p79
    %p86 = scmp.eq.s32.totalorder %s9, 1
    %p87 = por %p85, %p86
    %p88 = scmp.ne.s32.totalorder %s80, %s83
    %p89 = scmp.eq.s32.totalorder %s9, 0
    %p90 = por %p88, %p89
    %p91 = scmp.ne.s32.totalorder %s80, %s83
    %p92 = scmp.eq.s32.totalorder %s14, 1
    %p93 = por %p91, %p92
    %p94 = scmp.ne.s32.totalorder %s83, %s84
    %p95 = scmp.eq.s32.totalorder %s14, 0
    %p96 = por %p94, %p95
    %p97 = scmp.ne.s32.totalorder %s83, %s84
    %p98 = scmp.eq.s32.totalorder %s15, 1
    %p99 = por %p97, %p98
    %p101 = scmp.ne.s32.totalorder %s84, %s100
    %p102 = scmp.eq.s32.totalorder %s15, 0
    %p103 = por %p101, %p102
    %s104 = ssub.s32 %s16, %s28
    %s105 = ssub.s32 %s17, %s24
    %s106 = sor.u32 %s104, %s105
    %p107 = scmp.eq.s32.totalorder %s106, 0
    %s109 = sadd.s32 %s108, 1
    %s110 = scalar_select %p107, %s108, %s109
    %p113 = pneg %p107
    %p114 = scmp.eq.s32.totalorder %s9, 1
    %p115 = por %p113, %p114
    %p116 = scmp.ne.s32.totalorder %s108, %s111
    %p117 = scmp.eq.s32.totalorder %s9, 0
    %p118 = por %p116, %p117
    %p119 = scmp.ne.s32.totalorder %s108, %s111
    %p120 = scmp.eq.s32.totalorder %s14, 1
    %p121 = por %p119, %p120
    %p122 = scmp.ne.s32.totalorder %s111, %s112
    %p123 = scmp.eq.s32.totalorder %s14, 0
    %p124 = por %p122, %p123
    %p125 = scmp.ne.s32.totalorder %s111, %s112
    %p126 = scmp.eq.s32.totalorder %s15, 1
    %p127 = por %p125, %p126
    %p129 = scmp.ne.s32.totalorder %s112, %s128
    %p130 = scmp.eq.s32.totalorder %s15, 0
    %p131 = por %p129, %p130
    %p132 = scmp.le.s32.totalorder 1, %s9
    %p133 = scmp.lt.s32.totalorder %s9, 3
    %p134 = pnand %p132, %p133
    %p135 = pneg %p134
    // Predicated region
    $region9: #{vl_concat_forward.3} parent=5 // pred_check
      _
    $region10: #{vl_concat_forward.3} parent=5 // pred_check_branch
      %137 = sbr.rel (%p134) target = $region12
    $region11: #{vl_concat_forward.3} parent=5 // pred_region
      %s138 = ssub.s32 %s9, 1
      // Predicated region
      $region13: #{vl_concat_forward.3} parent=11 // pred_check
        %p139 = pneg %p70
      $region14: #{vl_concat_forward.3} parent=11 // pred_check_branch
        %141 = sbr.rel (%p139) target = $region16
      $region15: #{vl_concat_forward.3} parent=11 // pred_region
        _
      $region16: #{vl_concat_forward.3} parent=11 // pred_fallthru
        _
    $region12: #{vl_concat_forward.3} parent=5 // pred_fallthru
      _
    %p142 = scmp.lt.s32.totalorder %s9, 2
    // Predicated region
    $region17: #{vl_concat_forward.3} parent=5 // pred_check
      %p143 = pneg %p142
    $region18: #{vl_concat_forward.3} parent=5 // pred_check_branch
      %145 = sbr.rel (%p143) target = $region20
    $region19: #{vl_concat_forward.3} parent=5 // pred_region
      // Predicated region
      $region21: #{vl_concat_forward.3} parent=19 // pred_check
        %p146 = pneg %p43
      $region22: #{vl_concat_forward.3} parent=19 // pred_check_branch
        %148 = sbr.rel (%p146) target = $region24
      $region23: #{vl_concat_forward.3} parent=19 // pred_region
        %s149 = smul.u32 2, %s17
        %p150 = scmp.lt.s32.totalorder %s16, 1
        %s151 = scalar_select %p150, %s16, 1
        %p152 = scmp.lt.s32.totalorder %s149, 1
        %s153 = scalar_select %p152, %s149, 1
        %s154 = smul.addr %s151, 4
        %s155 = sadd.s32 %s153, %s154
        %s156 = smul.addr %s155, 8
        %s157 = scalar_lea.vmem %s0, %s156
        %s158 = smul.u32 2, %s17
      $region24: #{vl_concat_forward.3} parent=19 // pred_fallthru
        _
      // Predicated region
      $region25: #{vl_concat_forward.3} parent=19 // pred_check
        %p159 = pneg %p90
      $region26: #{vl_concat_forward.3} parent=19 // pred_check_branch
        %161 = sbr.rel (%p159) target = $region28
      $region27: #{vl_concat_forward.3} parent=19 // pred_region
        %p162 = scmp.lt.s32.totalorder %s16, 1
        %s163 = scalar_select %p162, %s16, 1
        %s164 = smul.addr %s163, 2
        %s165 = smul.addr %s164, 8
        %s166 = scalar_lea.vmem %s2, %s165
      $region28: #{vl_concat_forward.3} parent=19 // pred_fallthru
        _
    $region20: #{vl_concat_forward.3} parent=5 // pred_fallthru
      _
    %p167 = scmp.le.s32.totalorder 1, %s9
    %p168 = scmp.lt.s32.totalorder %s9, 3
    %p169 = pnand %p167, %p168
    %p170 = pneg %p169
    // Predicated region
    $region29: #{vl_concat_forward.3} parent=5 // pred_check
      _
    $region30: #{vl_concat_forward.3} parent=5 // pred_check_branch
      %172 = sbr.rel (%p169) target = $region32
    $region31: #{vl_concat_forward.3} parent=5 // pred_region
      %s173 = ssub.s32 %s9, 1
      %s174 = smul.u32 2, %s19
      %p175 = scmp.lt.s32.totalorder %s18, 1
      %s176 = scalar_select %p175, %s18, 1
      %p177 = scmp.lt.s32.totalorder %s174, 1
      %s178 = scalar_select %p177, %s174, 1
      %s179 = smul.addr %s176, 4
      %s180 = sadd.s32 %s178, %s179
      %s181 = smul.addr %s180, 8
      %s182 = scalar_lea.vmem %s0, %s181
      %p183 = pneg %p49
      %p184 = pneg %p46
      %p185 = pneg %p70
      %p186 = pneg %p67
      %p187 = scmp.lt.s32.totalorder %s18, 1
      %s188 = scalar_select %p187, %s18, 1
      %s189 = smul.addr %s188, 2
      %s190 = smul.addr %s189, 8
      %s191 = scalar_lea.vmem %s2, %s190
      %p192 = pneg %p96
      %p193 = pneg %p93
      %p194 = pneg %p124
      %p195 = pneg %p121
      %s196 = smul.u32 2, %s19
      %p197 = scmp.lt.s32.totalorder %s18, 1
      %s198 = scalar_select %p197, %s18, 1
      %p199 = scmp.lt.s32.totalorder %s196, 1
      %s200 = scalar_select %p199, %s196, 1
      %s201 = smul.addr %s198, 4
      %s202 = sadd.s32 %s200, %s201
      %s203 = smul.addr %s202, 8
      %s204 = scalar_lea.vmem %s3, %s203
      %s205 = smul.u32 2, %s19
      %p206 = scmp.lt.s32.totalorder %s18, 1
      %s207 = scalar_select %p206, %s18, 1
      %p208 = scmp.lt.s32.totalorder %s205, 1
      %s209 = scalar_select %p208, %s205, 1
      %s210 = smul.addr %s207, 4
      %s211 = sadd.s32 %s209, %s210
      %s212 = smul.addr %s211, 8
      %s213 = scalar_lea.vmem %s0, %s212
      %s214 = smul.u32 2, %s19
      %p215 = scmp.lt.s32.totalorder %s18, 1
      %s216 = scalar_select %p215, %s18, 1
      %s217 = smul.addr %s216, 2
      %s218 = smul.addr %s217, 8
      %s219 = scalar_lea.vmem %s2, %s218
      %s220 = smul.u32 2, %s19
      %p221 = scmp.lt.s32.totalorder %s18, 1
      %s222 = scalar_select %p221, %s18, 1
      %p223 = scmp.lt.s32.totalorder %s220, 1
      %s224 = scalar_select %p223, %s220, 1
      %s225 = smul.addr %s222, 4
      %s226 = sadd.s32 %s224, %s225
      %s227 = smul.addr %s226, 8
      %s228 = scalar_lea.vmem %s3, %s227
      %s229 = smul.u32 2, %s19
      %v230 = vld [vmem:[%s1] sm:$0xff]
      %v231 = vld [vmem:[%s1 + $0x8] sm:$0xff]
      %v232 = vld [vmem:[%s213] sm:$0xff]
      %v233 = vld [vmem:[%s213 + $0x8] sm:$0xff]
      %v234 = vld [vmem:[%s213 + $0x10] sm:$0xff]
      %v235 = vld [vmem:[%s213 + $0x18] sm:$0xff]
      %v236 = vld [vmem:[%s219] sm:$0xff]
      %v237 = vld [vmem:[%s219 + $0x8] sm:$0xff]
      %239 = vset.pattern.permute.xlu0 0
      %240 = vperm.xlu0 %239, %v236
      %v241 = vpop.permute.xlu0 %240
      %244 = vset.pattern.permute.xlu0 0
      %245 = vperm.xlu0 %244, %v237
      %v246 = vpop.permute.xlu0 %245
      %vm248 = vcmask 130048
      %v250 = vsel %vm248, %v230, 0
      %v253 = vsel %vm248, %v231, 0
      %255 = vmatprep.subr.mxu0 %v233
      %256 = vmatpush1.msra.mxu0 %v232
      %257 = vmatprep.subr.mxu0 %v235
      %258 = vmatpush1.msra.mxu0 %v234
      %259 = vmatprep.subr.mxu0 0.0
      %260 = vmatpush1.msra.mxu0 0.0
      %261 = vmatprep.subr.mxu0 0.0
      %262 = vmatpush1.msra.mxu0 0.0
      %263 = vmatprep.subr.mxu0 0.0
      %264 = vmatpush1.msra.mxu0 0.0
      %265 = vmatprep.subr.mxu0 0.0
      %266 = vmatpush1.msra.mxu0 0.0
      %267 = vmatprep.subr.mxu0 0.0
      %268 = vmatpush1.msra.mxu0 0.0
      %269 = vmatprep.subr.mxu0 0.0
      %270 = vmatpush1.msra.mxu0 0.0
      %271 = vmatprep.subr.mxu0 0.0
      %272 = vmatpush1.msra.mxu0 0.0
      %273 = vmatprep.subr.mxu0 0.0
      %274 = vmatpush1.msra.mxu0 0.0
      %275 = vmatprep.subr.mxu0 0.0
      %276 = vmatpush1.msra.mxu0 0.0
      %277 = vmatprep.subr.mxu0 0.0
      %278 = vmatpush1.msra.mxu0 0.0
      %279 = vmatprep.subr.mxu0 0.0
      %280 = vmatpush1.msra.mxu0 0.0
      %281 = vmatprep.subr.mxu0 0.0
      %282 = vmatpush1.msra.mxu0 0.0
      %283 = vmatprep.subr.mxu0 0.0
      %284 = vmatpush1.msra.mxu0 0.0
      %285 = vmatprep.subr.mxu0 0.0
      %286 = vmatpush1.msra.mxu0 0.0
      %287 = vmatprep.subr.mxu0 0.0
      %288 = vmatpush1.msra.mxu0 0.0
      %289 = vmatprep.subr.mxu0 0.0
      %290 = vmatpush1.msra.mxu0 0.0
      %291 = vmatprep.subr.mxu0 0.0
      %292 = vmatpush1.msra.mxu0 0.0
      %293 = vmatprep.subr.mxu0 0.0
      %294 = vmatpush1.msra.mxu0 0.0
      %295 = vmatprep.subr.mxu0 0.0
      %296 = vmatpush1.msra.mxu0 0.0
      %297 = vmatprep.subr.mxu0 0.0
      %298 = vmatpush1.msra.mxu0 0.0
      %299 = vmatprep.subr.mxu0 0.0
      %300 = vmatpush1.msra.mxu0 0.0
      %301 = vmatprep.subr.mxu0 0.0
      %302 = vmatpush1.msra.mxu0 0.0
      %303 = vmatprep.subr.mxu0 0.0
      %304 = vmatpush1.msra.mxu0 0.0
      %305 = vmatprep.subr.mxu0 0.0
      %306 = vmatpush1.msra.mxu0 0.0
      %307 = vmatprep.subr.mxu0 0.0
      %308 = vmatpush1.msra.mxu0 0.0
      %309 = vmatprep.subr.mxu0 0.0
      %310 = vmatpush1.msra.mxu0 0.0
      %311 = vmatprep.subr.mxu0 0.0
      %312 = vmatpush1.msra.mxu0 0.0
      %313 = vmatprep.subr.mxu0 0.0
      %314 = vmatpush1.msra.mxu0 0.0
      %315 = vmatprep.subr.mxu0 0.0
      %316 = vmatpush1.msra.mxu0 0.0
      %317 = vmatprep.subr.mxu0 0.0
      %318 = vmatpush1.msra.mxu0 0.0
      %319 = vmatprep.mubr.f32.mxu0 0.0
      %320 = vmatmul.mubr.f32.gmra.mrb[0].mxu0 %v250
      %v321 = vpop.f32.mrb[0].mxu0
      %v322 = vadd.f32 %v241, %v321
      %v323 = vpop.f32.mrb[0].mxu0
      %v324 = vadd.f32 %v241, %v323
      %325 = vmatprep.mubr.f32.mxu0 0.0
      %326 = vmatmul.mubr.f32.gmra.mrb[0].mxu0 %v253
      %v327 = vpop.f32.mrb[0].mxu0
      %v328 = vadd.f32 %v246, %v327
      %v329 = vpop.f32.mrb[0].mxu0
      %v330 = vadd.f32 %v246, %v329
      %331 = vdwg.mxu0
      %332 = vst [vmem:[%s228] sm:$0xff] %v322
      %333 = vst [vmem:[%s228 + $0x8] sm:$0xff] %v324
      %334 = vst [vmem:[%s228 + $0x10] sm:$0xff] %v328
      %335 = vst [vmem:[%s228 + $0x18] sm:$0xff] %v330
      %s336 = smul.u32 2, %s19
      %p337 = scmp.lt.s32.totalorder %s18, 1
      %s338 = scalar_select %p337, %s18, 1
      %p339 = scmp.lt.s32.totalorder %s336, 1
      %s340 = scalar_select %p339, %s336, 1
      %s341 = smul.addr %s338, 4
      %s342 = sadd.s32 %s340, %s341
      %s343 = smul.addr %s342, 8
      %s344 = scalar_lea.vmem %s3, %s343
      // Predicated region
      $region33: #{vl_concat_forward.3} parent=31 // pred_check
        %p345 = pneg %p121
      $region34: #{vl_concat_forward.3} parent=31 // pred_check_branch
        %347 = sbr.rel (%p345) target = $region36
      $region35: #{vl_concat_forward.3} parent=31 // pred_region
        %s348 = smul.u32 2, %s19
      $region36: #{vl_concat_forward.3} parent=31 // pred_fallthru
        _
    $region32: #{vl_concat_forward.3} parent=5 // pred_fallthru
      _
    %p349 = scmp.le.s32.totalorder 2, %s9
    // Predicated region
    $region37: #{vl_concat_forward.3} parent=5 // pred_check
      %p350 = pneg %p349
    $region38: #{vl_concat_forward.3} parent=5 // pred_check_branch
      %352 = sbr.rel (%p350) target = $region40
    $region39: #{vl_concat_forward.3} parent=5 // pred_region
      %s353 = ssub.s32 %s9, 2
      // Predicated region
      $region41: #{vl_concat_forward.3} parent=39 // pred_check
        %p354 = pneg %p127
      $region42: #{vl_concat_forward.3} parent=39 // pred_check_branch
        %356 = sbr.rel (%p354) target = $region44
      $region43: #{vl_concat_forward.3} parent=39 // pred_region
        %s357 = smul.u32 2, %s21
        %p358 = scmp.lt.s32.totalorder %s20, 1
        %s359 = scalar_select %p358, %s20, 1
        %p360 = scmp.lt.s32.totalorder %s357, 1
        %s361 = scalar_select %p360, %s357, 1
        %s362 = smul.addr %s359, 4
        %s363 = sadd.s32 %s361, %s362
        %s364 = smul.addr %s363, 8
        %s365 = scalar_lea.vmem %s3, %s364
      $region44: #{vl_concat_forward.3} parent=39 // pred_fallthru
        _
    $region40: #{vl_concat_forward.3} parent=5 // pred_fallthru
      _
  $region6: #{vl_concat_forward.3} parent=0 // loop_footer
    %s13 = sadd.s32 1, %s9
  $region7: #{vl_concat_forward.3} parent=0 // loop_footer_branch
    %8 = sbr.rel target = $region3
  $region8: #{vl_concat_forward.3} parent=0 // loop_exit
    _

</llo_original>
